<compile_context>
chip_gen: v7x
topology: tpu7x:2x2x1
jax: 0.10.0
libtpu: 0.0.40
codegen_flags: <defaults>
</compile_context>

<pallas_src>
import jax
import jax.numpy as jnp
from jax.experimental import pallas as pl
from jax.experimental.pallas import tpu as pltpu

_LANE_CANDIDATES = (8192, 4096, 2048, 1024, 512, 256, 128)


def _scale_exp_kernel(scale_ref, x_ref, o_ref):
    # scale_ref: (1, 1) f32 in SMEM; x_ref / o_ref: (tile_rows, lane) VMEM tiles.
    s = scale_ref[0, 0]
    x = x_ref[...].astype(jnp.float32)          # in-register upcast, no HBM traffic
    o_ref[...] = jnp.exp(x * s).astype(o_ref.dtype)


def _tile_config():
    """Return (tile_bytes, vmem_limit_bytes, use_core_parallel) per TPU generation."""
    try:
        kind = jax.devices()[0].device_kind.lower()
    except Exception:
        kind = ""
    if "v7" in kind:
        # 8 MiB tiles -> 32 MiB double-buffered in+out, safely under 64 MiB VMEM.
        return 8 << 20, 48 << 20, True
    if "v6" in kind:
        return 4 << 20, 32 << 20, False
    # v5e / v4 / unknown: 2 MiB tiles already sit near the HBM roofline.
    return 2 << 20, 24 << 20, False


def scale_exp(x: jax.Array, scale: jax.Array, *,
              min_pallas_elements: int = 1 << 20,
              donate_input: bool = False) -> jax.Array:
    """exp(x * scale) matching ScaleExp.forward; output keeps x's dtype."""
    orig_shape = x.shape
    total = int(x.size)
    scale_f32 = jnp.asarray(scale, dtype=jnp.float32).reshape(-1)[0]

    def _fused_fallback():
        # Trivially fusible by XLA; strictly faster than a standalone kernel
        # for tiny tensors and the only copy-free option for ragged numel.
        return jnp.exp(x.astype(jnp.float32) * scale_f32).astype(x.dtype)

    lane = next((c for c in _LANE_CANDIDATES if total % c == 0), None)
    if total == 0 or lane is None or total < min_pallas_elements:
        return _fused_fallback()

    rows = total // lane
    x2d = x.reshape(rows, lane)                 # pure view, no pad / no copy
    itemsize = x.dtype.itemsize

    tile_bytes, vmem_limit, core_parallel = _tile_config()
    tile_rows = int(max(8, (tile_bytes // (lane * itemsize)) // 8 * 8))
    if tile_rows >= rows:
        tile_rows = rows                        # single tile; block == full dim is legal
    num_tiles = pl.cdiv(rows, tile_rows)        # ragged last tile masked by Pallas

    if core_parallel and num_tiles >= 2:
        dim_sem = (getattr(pltpu, "CORE_PARALLEL", "parallel"),)
    else:
        dim_sem = ("parallel",)

    out2d = pl.pallas_call(
        _scale_exp_kernel,
        out_shape=jax.ShapeDtypeStruct((rows, lane), x.dtype),
        grid=(num_tiles,),
        in_specs=[
            pl.BlockSpec(memory_space=pltpu.MemorySpace.SMEM),    # scalar "scale" param
            pl.BlockSpec((tile_rows, lane), lambda i: (i, 0)),    # pipelined row tiles
        ],
        out_specs=pl.BlockSpec((tile_rows, lane), lambda i: (i, 0)),
        compiler_params=pltpu.CompilerParams(
            dimension_semantics=dim_sem,
            vmem_limit_bytes=vmem_limit,
        ),
        cost_estimate=pl.CostEstimate(
            flops=total,
            transcendentals=total,
            bytes_accessed=2 * total * itemsize,
        ),
        # x is operand index 1 (after the SMEM scalar); only alias if the caller
        # truly does not need x afterwards.  Saves allocation, not bandwidth.
        input_output_aliases=({1: 0} if donate_input else {}),
    )(scale_f32.reshape(1, 1), x2d)

    return out2d.reshape(orig_shape)


if __name__ == "__main__":
    # Deterministic parameter init: ScaleExp(init_value=1.0) -> scale = [1.0]
    scale_param = jnp.array([1.0], dtype=jnp.float32)

    key = jax.random.PRNGKey(0)
    x = jax.random.normal(key, (2, 4, 16, 16), dtype=jnp.float32)

    # Force the Pallas path even for this small test tensor.
    y = scale_exp(x, scale_param, min_pallas_elements=0)
    jax.block_until_ready(y)

    y_ref = jnp.exp(x * scale_param[0])
    assert y.shape == x.shape and y.dtype == x.dtype
    assert jnp.allclose(y, y_ref, atol=1e-6, rtol=1e-6)

    # Also exercise the default small-input fused bypass.
    y_small = scale_exp(x, scale_param)
    assert jnp.allclose(y_small, y_ref, atol=1e-6, rtol=1e-6)

    print("KERNEL_OK")
</pallas_src>

<mosaic_0001>
module attributes {stable_mosaic.version = 11 : i64} {
  func.func @_scale_exp_kernel(%arg0: i32, %arg1: memref<1x1xf32, #tpu.memory_space<smem>>, %arg2: memref<1x2048xf32, #tpu.memory_space<vmem>>, %arg3: memref<1x2048xf32, #tpu.memory_space<vmem>>) attributes {dimension_semantics = [#tpu.dimension_semantics<parallel>], iteration_bounds = array<i64: 1>, scalar_prefetch = 0 : i64, scratch_operands = 0 : i64, tpu.core_type = #tpu.core_type<tc>, window_params = [{transform_indices = @transform_0, window_bounds = array<i64: 1, 1>}, {transform_indices = @transform_1, window_bounds = array<i64: 1, 2048>}, {transform_indices = @transform_2, window_bounds = array<i64: 1, 2048>}]} {
    %c0 = arith.constant 0 : index
    %c0_0 = arith.constant 0 : index
    %0 = memref.load %arg1[%c0, %c0_0] : memref<1x1xf32, #tpu.memory_space<smem>>
    %c0_1 = arith.constant 0 : index
    %c0_2 = arith.constant 0 : index
    %1 = vector.load %arg2[%c0_1, %c0_2] : memref<1x2048xf32, #tpu.memory_space<vmem>>, vector<1x2048xf32>
    %2 = vector.broadcast %0 : f32 to vector<1x2048xf32>
    %3 = arith.mulf %1, %2 : vector<1x2048xf32>
    %4 = math.exp %3 : vector<1x2048xf32>
    %c0_3 = arith.constant 0 : index
    %c0_4 = arith.constant 0 : index
    %5 = vector.load %arg3[%c0_3, %c0_4] : memref<1x2048xf32, #tpu.memory_space<vmem>>, vector<1x2048xf32>
    tpu.vector_store %arg3[%c0_3, %c0_4], %4 {strides = array<i32>} : memref<1x2048xf32, #tpu.memory_space<vmem>>, vector<1x2048xf32>,
    return
  }
  func.func @transform_0(%arg0: i32) -> (i32, i32) {
    %c0_i32 = arith.constant 0 : i32
    %c0_i32_0 = arith.constant 0 : i32
    %c0_i32_1 = arith.constant 0 : i32
    return %c0_i32, %c0_i32_0 : i32, i32
  }
  func.func @transform_1(%arg0: i32) -> (i32, i32) {
    %c0_i32 = arith.constant 0 : i32
    %c0_i32_0 = arith.constant 0 : i32
    return %arg0, %c0_i32 : i32, i32
  }
  func.func @transform_2(%arg0: i32) -> (i32, i32) {
    %c0_i32 = arith.constant 0 : i32
    %c0_i32_0 = arith.constant 0 : i32
    return %arg0, %c0_i32 : i32, i32
  }
}

</mosaic_0001>

<llo_original>
// kernel: tpu_custom_call.1
$region0: #{tpu_custom_call.1}
  #allocation0 [shape = 'u32[]', space=smem, size = 0x4, offset = 0x4, fixed_abs, tag = 'smem constant byte address 0x4 - core index']
  #allocation1 [shape = 'u32[144,128]{1,0:T(1,128)}', space=vmem, size = 0x12000, scoped, tag = 'internal scratch']
  #allocation2 [shape = 'f32[1,1]{1,0:T(1,128)S(6)}', space=smem, size = 0x200, scoped, tag = 'scoped memory for tpu_custom_call.1']
  %s0 = inlined_call_operand.<no memory space> [shape: f32[1,1], index: 0, kind: input, shape index: {}]
  %s1 = inlined_call_operand.hbm [shape: f32[1,2048], index: 1, kind: input, shape index: {}]
  %s2 = inlined_call_operand.hbm [shape: f32[1,2048], index: 2, kind: output, shape index: {}]
  %s3 = sld [smem:[#allocation0]]
  $region22: #{tpu_custom_call.1} parent=0
    _
  %s5 = ssub.s32 1, %s3
  %s6 = scalar_select 0, %s5, %s3
  %7 = sst [smem:[#allocation2]] %s0
  $region1: #{tpu_custom_call.1} parent=0
    #allocation3 [shape = 'u8[8192]{0}', space=vmem, size = 0x2000, scoped, tag = 'input window, operand 1, single buffered']
    #allocation4 [shape = 's32[1]{0}', space=sflag, size = 0x4, scoped, tag = 'scoped memory for tpu_custom_call.1']
    #allocation5 [shape = 's32[1]{0}', space=sflag, size = 0x4, scoped, tag = 'scoped memory for tpu_custom_call.1']
    #allocation6 [shape = 'u8[8192]{0}', space=vmem, size = 0x2000, scoped, tag = 'output window, operand 0, single buffered']
    %8 = vsyncpa [#allocation4], 0
    %9 = vsyncpa [#allocation5], 0
    // Predicated region
    $region2: #{tpu_custom_call.1} parent=1 // pred_check
      _
    $region3: #{tpu_custom_call.1} parent=1 // pred_check_branch
      %11 = sbr.rel (0) target = $region5
    $region4: #{tpu_custom_call.1} parent=1 // pred_region
      _
    $region5: #{tpu_custom_call.1} parent=1 // pred_fallthru
      _
    // Predicated region
    $region6: #{tpu_custom_call.1} parent=1 // pred_check
      _
    $region7: #{tpu_custom_call.1} parent=1 // pred_check_branch
      %13 = sbr.rel (0) target = $region9
    $region8: #{tpu_custom_call.1} parent=1 // pred_region
      %s15 = ssub.s32 256, 256
      %16 = vsyncadd [#allocation4], %s15
      %s18 = sshll.u32 [#allocation3], 4
      %s19 = int_to_ptr.vmem [resolvable:$true] %s18
      %21 = dma.hbm_to_vmem [thread:$0]  %s1, 256, %s19, [#allocation4]
    $region9: #{tpu_custom_call.1} parent=1 // pred_fallthru
      _
    // Predicated region
    $region10: #{tpu_custom_call.1} parent=1 // pred_check
      _
    $region11: #{tpu_custom_call.1} parent=1 // pred_check_branch
      %23 = sbr.rel (0) target = $region13
    $region12: #{tpu_custom_call.1} parent=1 // pred_region
      %24 = dma.done [#allocation4], 256
    $region13: #{tpu_custom_call.1} parent=1 // pred_fallthru
      _
    %s25 = sld [smem:[#allocation2]]
    %v26 = vld [vmem:[#allocation3] sm:$0xff]
    %v27 = vld [vmem:[#allocation3 + $0x8] sm:$0xff]
    %v28 = vstv %s25
    %v29 = vmul.f32 %v26, %v28
    %v30 = vmul.f32 %v27, %v28
    %v31 = vmul.f32 %v29, 1.442695
    %v32 = vpow.pop %v31
    %v33 = vmul.f32 %v30, 1.442695
    %v34 = vpow.pop %v33
    %35 = vst [vmem:[#allocation6] sm:$0xff] %v32
    %36 = vst [vmem:[#allocation6 + $0x8] sm:$0xff] %v34
    // Predicated region
    $region14: #{tpu_custom_call.1} parent=1 // pred_check
      _
    $region15: #{tpu_custom_call.1} parent=1 // pred_check_branch
      %38 = sbr.rel (0) target = $region17
    $region16: #{tpu_custom_call.1} parent=1 // pred_region
      %s40 = ssub.s32 256, 256
      %41 = vsyncadd [#allocation5], %s40
      %s43 = sshll.u32 [#allocation6], 4
      %s44 = int_to_ptr.vmem [resolvable:$true] %s43
      %46 = dma.vmem_to_hbm [thread:$0]  %s44, 256, %s2, [#allocation5]
    $region17: #{tpu_custom_call.1} parent=1 // pred_fallthru
      _
    // Predicated region
    $region18: #{tpu_custom_call.1} parent=1 // pred_check
      _
    $region19: #{tpu_custom_call.1} parent=1 // pred_check_branch
      %48 = sbr.rel (0) target = $region21
    $region20: #{tpu_custom_call.1} parent=1 // pred_region
      %49 = dma.done [#allocation5], 256
    $region21: #{tpu_custom_call.1} parent=1 // pred_fallthru
      _
    %50 = vsyncpa [#allocation4], 1
    %51 = vsyncpa [#allocation5], 1

</llo_original>
